<compile_context>
chip_gen: v5e
topology: v5e:2x2
jax: 0.10.0
libtpu: 0.0.40
codegen_flags: <defaults>
</compile_context>

<pallas_src>
import math

import jax
import jax.numpy as jnp
from jax.experimental import pallas as pl
from jax.experimental.pallas import tpu as pltpu

THRESHOLD = 0.5
# sigmoid(s) > t  <=>  s > logit(t)   (exact for t in (0,1); 0.0 for t=0.5)
LOGIT_THRESHOLD = math.log(THRESHOLD / (1.0 - THRESHOLD))


# --------------------------------------------------------------------------
# Fused kernel: image head + embedding gather + LSTM head + combine linear.
# `offs` are static row offsets into the narrow parameter slab.
# --------------------------------------------------------------------------
def _make_kernel(offs):
    def kernel(x_img_ref, cap_ref, emb_ref, wide_ref, narrow_ref,
               scores_ref, xbuf_ref):
        B, Cin, HW = x_img_ref.shape
        T = cap_ref.shape[1]
        E = emb_ref.shape[1]
        fourH = wide_ref.shape[1]
        Hh = fourH // 4
        C = scores_ref.shape[1]

        # ---------------- image score head ---------------------------------
        # mean pool = XLU lane reduce; then a tiny [B,Cin]@[Cin,C] matmul.
        pooled = jnp.sum(x_img_ref[...], axis=-1) * (1.0 / HW)        # [B, Cin]
        img_w = narrow_ref[offs["img_w"]:offs["img_w"] + Cin, :]
        img_b = narrow_ref[offs["img_b"]:offs["img_b"] + 1, :]
        img_s = jnp.dot(pooled, img_w,
                        preferred_element_type=jnp.float32) + img_b   # [B, C]

        # ---------------- in-kernel embedding gather, (t, b)-major ----------
        for t in range(T):
            for b in range(B):
                idx = cap_ref[b, t]                                   # SMEM scalar
                r = t * B + b
                xbuf_ref[r:r + 1, :] = emb_ref[pl.ds(idx, 1), :]

        # ---------------- text score head (forward LSTM) --------------------
        wih = wide_ref[0:E, :]                                        # [E, 4H]
        whh = wide_ref[E:E + Hh, :]                                   # [H, 4H]
        bg = wide_ref[E + Hh:E + Hh + 1, :]                           # [1, 4H]

        # Input projection for ALL timesteps at once (off the serial path).
        gates_x = jnp.dot(xbuf_ref[...], wih,
                          preferred_element_type=jnp.float32) + bg    # [T*B, 4H]

        # Lane mask selecting the 'g' gate block (tanh); others are sigmoid.
        lane = jax.lax.broadcasted_iota(jnp.int32, (B, fourH), 1)
        g_mask = (lane >= 2 * Hh) & (lane < 3 * Hh)

        h = jnp.zeros((B, Hh), jnp.float32)
        c = jnp.zeros((B, Hh), jnp.float32)
        for t in range(T):                         # static unroll, T small
            # one lane-dense [B,H]@[H,4H] matmul + one sublane row-slice / step
            gates = gates_x[t * B:(t + 1) * B, :] + jnp.dot(
                h, whh, preferred_element_type=jnp.float32)           # [B, 4H]
            # single EUP tanh pass / step: sigmoid(x) = 0.5*(1 + tanh(x/2))
            pre = jnp.where(g_mask, gates, 0.5 * gates)
            th = jnp.tanh(pre)
            act = jnp.where(g_mask, th, 0.5 * th + 0.5)
            i_g = act[:, 0:Hh]
            f_g = act[:, Hh:2 * Hh]
            g_g = act[:, 2 * Hh:3 * Hh]
            o_g = act[:, 3 * Hh:4 * Hh]
            c = f_g * c + i_g * g_g
            h = o_g * jnp.tanh(c)

        wout = narrow_ref[offs["wout"]:offs["wout"] + Hh, :]
        bout = narrow_ref[offs["bout"]:offs["bout"] + 1, :]
        txt_s = jnp.dot(h, wout,
                        preferred_element_type=jnp.float32) + bout    # [B, C]

        # ---------------- combine: Linear(2C -> C) on cat(img, txt) ---------
        w_ci = narrow_ref[offs["w_ci"]:offs["w_ci"] + C, :]
        w_ct = narrow_ref[offs["w_ct"]:offs["w_ct"] + C, :]
        b_c = narrow_ref[offs["b_c"]:offs["b_c"] + 1, :]
        scores_ref[...] = (
            jnp.dot(img_s, w_ci, preferred_element_type=jnp.float32)
            + jnp.dot(txt_s, w_ct, preferred_element_type=jnp.float32)
            + b_c
        )

    return kernel


# --------------------------------------------------------------------------
# One-time parameter packing (hoisted out of the per-call forward).
# --------------------------------------------------------------------------
def prepare_params(params):
    E, fourH = params["wih"].shape
    Hh = params["whh"].shape[0]
    Cin, C = params["img_w"].shape
    assert fourH == 4 * Hh

    # wide slab [E+H+1, 4H]: wih | whh | bg  (all 4H-lane-dense rows)
    wide = jnp.concatenate(
        [params["wih"], params["whh"], params["bg"]], axis=0
    ).astype(jnp.float32)

    # narrow slab [*, C]: every C-wide weight/bias, 8-row aligned where useful.
    pieces, offs = [], {}
    cur = 0

    def add(name, arr, align8=False):
        nonlocal cur
        if align8 and cur % 8 != 0:
            pad = 8 - cur % 8
            pieces.append(jnp.zeros((pad, C), jnp.float32))
            cur += pad
        offs[name] = cur
        pieces.append(arr.astype(jnp.float32))
        cur += arr.shape[0]

    add("img_w", params["img_w"])
    add("img_b", params["img_b"])
    add("wout", params["wout"], align8=True)
    add("bout", params["bout"])
    add("w_ci", params["comb_w"][:C, :], align8=True)   # combine weight, image half
    add("w_ct", params["comb_w"][C:, :], align8=True)   # combine weight, text half
    add("b_c", params["comb_b"])
    narrow = jnp.concatenate(pieces, axis=0)

    return {
        "emb": params["emb_table"].astype(jnp.float32),
        "wide": wide,
        "narrow": narrow,
        "offsets": offs,
    }


# --------------------------------------------------------------------------
# Module forward: one pallas_call + a free fused compare for `preds`.
# --------------------------------------------------------------------------
def rcnn_lstm_forward(prepared, images, captions):
    B, Cin, Hs, Ws = images.shape
    T = captions.shape[1]
    E = prepared["emb"].shape[1]
    C = prepared["narrow"].shape[1]

    x_img = images.reshape(B, Cin, Hs * Ws).astype(jnp.float32)  # contiguous reshape
    cap = captions.astype(jnp.int32)

    scores = pl.pallas_call(
        _make_kernel(prepared["offsets"]),
        out_shape=jax.ShapeDtypeStruct((B, C), jnp.float32),
        in_specs=[
            pl.BlockSpec(memory_space=pltpu.MemorySpace.VMEM),   # images [B,Cin,H*W]
            pl.BlockSpec(memory_space=pltpu.MemorySpace.SMEM),   # captions (scalar reads)
            pl.BlockSpec(memory_space=pltpu.MemorySpace.VMEM),   # embedding table
            pl.BlockSpec(memory_space=pltpu.MemorySpace.VMEM),   # wide slab
            pl.BlockSpec(memory_space=pltpu.MemorySpace.VMEM),   # narrow slab
        ],
        out_specs=pl.BlockSpec(memory_space=pltpu.MemorySpace.VMEM),
        scratch_shapes=[pltpu.VMEM((T * B, E), jnp.float32)],    # gathered embeddings
    )(x_img, cap, prepared["emb"], prepared["wide"], prepared["narrow"])

    # sigmoid(s) > thr  <=>  s > logit(thr): one fused compare outside the kernel.
    preds = scores > LOGIT_THRESHOLD
    return preds, scores


# --------------------------------------------------------------------------
# Pure-JAX reference (same stand-in semantics) for a numerical sanity check.
# --------------------------------------------------------------------------
def _reference_forward(params, images, captions):
    B, Cin, H, W = images.shape
    T = captions.shape[1]
    Hh = params["whh"].shape[0]

    pooled = images.reshape(B, Cin, H * W).mean(axis=-1)
    img_s = pooled @ params["img_w"] + params["img_b"]

    emb = jnp.take(params["emb_table"], captions, axis=0)               # [B, T, E]
    h = jnp.zeros((B, Hh), jnp.float32)
    c = jnp.zeros((B, Hh), jnp.float32)
    for t in range(T):
        gates = emb[:, t, :] @ params["wih"] + h @ params["whh"] + params["bg"]
        i = jax.nn.sigmoid(gates[:, 0:Hh])
        f = jax.nn.sigmoid(gates[:, Hh:2 * Hh])
        g = jnp.tanh(gates[:, 2 * Hh:3 * Hh])
        o = jax.nn.sigmoid(gates[:, 3 * Hh:4 * Hh])
        c = f * c + i * g
        h = o * jnp.tanh(c)
    txt_s = h @ params["wout"] + params["bout"]

    scores = jnp.concatenate([img_s, txt_s], axis=1) @ params["comb_w"] + params["comb_b"]
    preds = jax.nn.sigmoid(scores) > THRESHOLD
    return preds, scores


if __name__ == "__main__":
    key = jax.random.PRNGKey(0)
    B, Cin, Hs, Ws = 2, 4, 16, 16          # images  [B, Cin, H, W]
    T, E, Hh = 8, 32, 32                   # seq len, embedding dim, LSTM hidden
    NUM_CLASSES = 8                        # len(classes)
    VOCAB = 50

    keys = jax.random.split(key, 13)
    images = jax.random.normal(keys[0], (B, Cin, Hs, Ws), jnp.float32)
    captions = jax.random.randint(keys[1], (B, T), 0, VOCAB)

    scale = 0.1
    params = {
        "emb_table": scale * jax.random.normal(keys[2], (VOCAB, E), jnp.float32),
        "img_w": scale * jax.random.normal(keys[3], (Cin, NUM_CLASSES), jnp.float32),
        "img_b": scale * jax.random.normal(keys[4], (1, NUM_CLASSES), jnp.float32),
        "wih": scale * jax.random.normal(keys[5], (E, 4 * Hh), jnp.float32),
        "whh": scale * jax.random.normal(keys[6], (Hh, 4 * Hh), jnp.float32),
        "bg": scale * jax.random.normal(keys[7], (1, 4 * Hh), jnp.float32),
        "wout": scale * jax.random.normal(keys[8], (Hh, NUM_CLASSES), jnp.float32),
        "bout": scale * jax.random.normal(keys[9], (1, NUM_CLASSES), jnp.float32),
        "comb_w": scale * jax.random.normal(
            keys[10], (2 * NUM_CLASSES, NUM_CLASSES), jnp.float32
        ),
        "comb_b": scale * jax.random.normal(keys[11], (1, NUM_CLASSES), jnp.float32),
    }

    prepared = prepare_params(params)      # one-time packing (not per forward)

    preds, scores = rcnn_lstm_forward(prepared, images, captions)
    jax.block_until_ready((preds, scores))
    assert preds.shape == (B, NUM_CLASSES) and scores.shape == (B, NUM_CLASSES)
    assert preds.dtype == jnp.bool_ and scores.dtype == jnp.float32

    ref_preds, ref_scores = _reference_forward(params, images, captions)
    assert jnp.allclose(scores, ref_scores, atol=1e-3, rtol=1e-3), "score mismatch"

    print("KERNEL_OK")
</pallas_src>

<mosaic_0001>
module attributes {stable_mosaic.version = 11 : i64} {
  func.func @kernel(%arg0: memref<2x4x256xf32, #tpu.memory_space<vmem>>, %arg1: memref<2x8xi32, #tpu.memory_space<smem>>, %arg2: memref<50x32xf32, #tpu.memory_space<vmem>>, %arg3: memref<65x128xf32, #tpu.memory_space<vmem>>, %arg4: memref<65x8xf32, #tpu.memory_space<vmem>>, %arg5: memref<2x8xf32, #tpu.memory_space<vmem>>, %arg6: memref<16x32xf32, #tpu.memory_space<vmem>>) attributes {dimension_semantics = [], scalar_prefetch = 0 : i64, scratch_operands = 1 : i64, tpu.core_type = #tpu.core_type<tc>} {
    %c0 = arith.constant 0 : index
    %c0_0 = arith.constant 0 : index
    %c0_1 = arith.constant 0 : index
    %0 = vector.load %arg0[%c0, %c0_0, %c0_1] : memref<2x4x256xf32, #tpu.memory_space<vmem>>, vector<2x4x256xf32>
    %cst = arith.constant dense<0.000000e+00> : vector<2x4xf32>
    %1 = vector.multi_reduction <add>, %0, %cst [2] : vector<2x4x256xf32> to vector<2x4xf32>
    %cst_2 = arith.constant 3.906250e-03 : f32
    %2 = vector.broadcast %cst_2 : f32 to vector<2x4xf32>
    %3 = arith.mulf %1, %2 : vector<2x4xf32>
    %c0_3 = arith.constant 0 : index
    %c0_4 = arith.constant 0 : index
    %4 = vector.load %arg4[%c0_3, %c0_4] : memref<65x8xf32, #tpu.memory_space<vmem>>, vector<4x8xf32>
    %c4 = arith.constant 4 : index
    %c0_5 = arith.constant 0 : index
    %5 = vector.load %arg4[%c4, %c0_5] : memref<65x8xf32, #tpu.memory_space<vmem>>, vector<1x8xf32>
    %cst_6 = arith.constant dense<0.000000e+00> : vector<2x8xf32>
    %6 = tpu.matmul %3, %4, %cst_6 {dimension_numbers = #tpu.dot_dimension_numbers<[1], [0], [0], [1], [0, 0, 1, 1], [], []>} : vector<2x4xf32>, vector<4x8xf32>, vector<2x8xf32> -> vector<2x8xf32>
    %7 = vector.broadcast %5 : vector<1x8xf32> to vector<2x8xf32>
    %8 = arith.addf %6, %7 : vector<2x8xf32>
    %c0_7 = arith.constant 0 : index
    %c0_8 = arith.constant 0 : index
    %9 = memref.load %arg1[%c0_7, %c0_8] : memref<2x8xi32, #tpu.memory_space<smem>>
    %10 = arith.index_cast %9 : i32 to index
    %c0_9 = arith.constant 0 : index
    %11 = vector.load %arg2[%10, %c0_9] : memref<50x32xf32, #tpu.memory_space<vmem>>, vector<1x32xf32>
    %c0_10 = arith.constant 0 : index
    %c0_11 = arith.constant 0 : index
    %12 = vector.load %arg6[%c0_10, %c0_11] : memref<16x32xf32, #tpu.memory_space<vmem>>, vector<1x32xf32>
    tpu.vector_store %arg6[%c0_10, %c0_11], %11 {strides = array<i32>} : memref<16x32xf32, #tpu.memory_space<vmem>>, vector<1x32xf32>,
    %c1 = arith.constant 1 : index
    %c0_12 = arith.constant 0 : index
    %13 = memref.load %arg1[%c1, %c0_12] : memref<2x8xi32, #tpu.memory_space<smem>>
    %14 = arith.index_cast %13 : i32 to index
    %c0_13 = arith.constant 0 : index
    %15 = vector.load %arg2[%14, %c0_13] : memref<50x32xf32, #tpu.memory_space<vmem>>, vector<1x32xf32>
    %c1_14 = arith.constant 1 : index
    %c0_15 = arith.constant 0 : index
    %16 = vector.load %arg6[%c1_14, %c0_15] : memref<16x32xf32, #tpu.memory_space<vmem>>, vector<1x32xf32>
    tpu.vector_store %arg6[%c1_14, %c0_15], %15 {strides = array<i32>} : memref<16x32xf32, #tpu.memory_space<vmem>>, vector<1x32xf32>,
    %c0_16 = arith.constant 0 : index
    %c1_17 = arith.constant 1 : index
    %17 = memref.load %arg1[%c0_16, %c1_17] : memref<2x8xi32, #tpu.memory_space<smem>>
    %18 = arith.index_cast %17 : i32 to index
    %c0_18 = arith.constant 0 : index
    %19 = vector.load %arg2[%18, %c0_18] : memref<50x32xf32, #tpu.memory_space<vmem>>, vector<1x32xf32>
    %c2 = arith.constant 2 : index
    %c0_19 = arith.constant 0 : index
    %20 = vector.load %arg6[%c2, %c0_19] : memref<16x32xf32, #tpu.memory_space<vmem>>, vector<1x32xf32>
    tpu.vector_store %arg6[%c2, %c0_19], %19 {strides = array<i32>} : memref<16x32xf32, #tpu.memory_space<vmem>>, vector<1x32xf32>,
    %c1_20 = arith.constant 1 : index
    %c1_21 = arith.constant 1 : index
    %21 = memref.load %arg1[%c1_20, %c1_21] : memref<2x8xi32, #tpu.memory_space<smem>>
    %22 = arith.index_cast %21 : i32 to index
    %c0_22 = arith.constant 0 : index
    %23 = vector.load %arg2[%22, %c0_22] : memref<50x32xf32, #tpu.memory_space<vmem>>, vector<1x32xf32>
    %c3 = arith.constant 3 : index
    %c0_23 = arith.constant 0 : index
    %24 = vector.load %arg6[%c3, %c0_23] : memref<16x32xf32, #tpu.memory_space<vmem>>, vector<1x32xf32>
    tpu.vector_store %arg6[%c3, %c0_23], %23 {strides = array<i32>} : memref<16x32xf32, #tpu.memory_space<vmem>>, vector<1x32xf32>,
    %c0_24 = arith.constant 0 : index
    %c2_25 = arith.constant 2 : index
    %25 = memref.load %arg1[%c0_24, %c2_25] : memref<2x8xi32, #tpu.memory_space<smem>>
    %26 = arith.index_cast %25 : i32 to index
    %c0_26 = arith.constant 0 : index
    %27 = vector.load %arg2[%26, %c0_26] : memref<50x32xf32, #tpu.memory_space<vmem>>, vector<1x32xf32>
    %c4_27 = arith.constant 4 : index
    %c0_28 = arith.constant 0 : index
    %28 = vector.load %arg6[%c4_27, %c0_28] : memref<16x32xf32, #tpu.memory_space<vmem>>, vector<1x32xf32>
    tpu.vector_store %arg6[%c4_27, %c0_28], %27 {strides = array<i32>} : memref<16x32xf32, #tpu.memory_space<vmem>>, vector<1x32xf32>,
    %c1_29 = arith.constant 1 : index
    %c2_30 = arith.constant 2 : index
    %29 = memref.load %arg1[%c1_29, %c2_30] : memref<2x8xi32, #tpu.memory_space<smem>>
    %30 = arith.index_cast %29 : i32 to index
    %c0_31 = arith.constant 0 : index
    %31 = vector.load %arg2[%30, %c0_31] : memref<50x32xf32, #tpu.memory_space<vmem>>, vector<1x32xf32>
    %c5 = arith.constant 5 : index
    %c0_32 = arith.constant 0 : index
    %32 = vector.load %arg6[%c5, %c0_32] : memref<16x32xf32, #tpu.memory_space<vmem>>, vector<1x32xf32>
    tpu.vector_store %arg6[%c5, %c0_32], %31 {strides = array<i32>} : memref<16x32xf32, #tpu.memory_space<vmem>>, vector<1x32xf32>,
    %c0_33 = arith.constant 0 : index
    %c3_34 = arith.constant 3 : index
    %33 = memref.load %arg1[%c0_33, %c3_34] : memref<2x8xi32, #tpu.memory_space<smem>>
    %34 = arith.index_cast %33 : i32 to index
    %c0_35 = arith.constant 0 : index
    %35 = vector.load %arg2[%34, %c0_35] : memref<50x32xf32, #tpu.memory_space<vmem>>, vector<1x32xf32>
    %c6 = arith.constant 6 : index
    %c0_36 = arith.constant 0 : index
    %36 = vector.load %arg6[%c6, %c0_36] : memref<16x32xf32, #tpu.memory_space<vmem>>, vector<1x32xf32>
    tpu.vector_store %arg6[%c6, %c0_36], %35 {strides = array<i32>} : memref<16x32xf32, #tpu.memory_space<vmem>>, vector<1x32xf32>,
    %c1_37 = arith.constant 1 : index
    %c3_38 = arith.constant 3 : index
    %37 = memref.load %arg1[%c1_37, %c3_38] : memref<2x8xi32, #tpu.memory_space<smem>>
    %38 = arith.index_cast %37 : i32 to index
    %c0_39 = arith.constant 0 : index
    %39 = vector.load %arg2[%38, %c0_39] : memref<50x32xf32, #tpu.memory_space<vmem>>, vector<1x32xf32>
    %c7 = arith.constant 7 : index
    %c0_40 = arith.constant 0 : index
    %40 = vector.load %arg6[%c7, %c0_40] : memref<16x32xf32, #tpu.memory_space<vmem>>, vector<1x32xf32>
    tpu.vector_store %arg6[%c7, %c0_40], %39 {strides = array<i32>} : memref<16x32xf32, #tpu.memory_space<vmem>>, vector<1x32xf32>,
    %c0_41 = arith.constant 0 : index
    %c4_42 = arith.constant 4 : index
    %41 = memref.load %arg1[%c0_41, %c4_42] : memref<2x8xi32, #tpu.memory_space<smem>>
    %42 = arith.index_cast %41 : i32 to index
    %c0_43 = arith.constant 0 : index
    %43 = vector.load %arg2[%42, %c0_43] : memref<50x32xf32, #tpu.memory_space<vmem>>, vector<1x32xf32>
    %c8 = arith.constant 8 : index
    %c0_44 = arith.constant 0 : index
    %44 = vector.load %arg6[%c8, %c0_44] : memref<16x32xf32, #tpu.memory_space<vmem>>, vector<1x32xf32>
    tpu.vector_store %arg6[%c8, %c0_44], %43 {strides = array<i32>} : memref<16x32xf32, #tpu.memory_space<vmem>>, vector<1x32xf32>,
    %c1_45 = arith.constant 1 : index
    %c4_46 = arith.constant 4 : index
    %45 = memref.load %arg1[%c1_45, %c4_46] : memref<2x8xi32, #tpu.memory_space<smem>>
    %46 = arith.index_cast %45 : i32 to index
    %c0_47 = arith.constant 0 : index
    %47 = vector.load %arg2[%46, %c0_47] : memref<50x32xf32, #tpu.memory_space<vmem>>, vector<1x32xf32>
    %c9 = arith.constant 9 : index
    %c0_48 = arith.constant 0 : index
    %48 = vector.load %arg6[%c9, %c0_48] : memref<16x32xf32, #tpu.memory_space<vmem>>, vector<1x32xf32>
    tpu.vector_store %arg6[%c9, %c0_48], %47 {strides = array<i32>} : memref<16x32xf32, #tpu.memory_space<vmem>>, vector<1x32xf32>,
    %c0_49 = arith.constant 0 : index
    %c5_50 = arith.constant 5 : index
    %49 = memref.load %arg1[%c0_49, %c5_50] : memref<2x8xi32, #tpu.memory_space<smem>>
    %50 = arith.index_cast %49 : i32 to index
    %c0_51 = arith.constant 0 : index
    %51 = vector.load %arg2[%50, %c0_51] : memref<50x32xf32, #tpu.memory_space<vmem>>, vector<1x32xf32>
    %c10 = arith.constant 10 : index
    %c0_52 = arith.constant 0 : index
    %52 = vector.load %arg6[%c10, %c0_52] : memref<16x32xf32, #tpu.memory_space<vmem>>, vector<1x32xf32>
    tpu.vector_store %arg6[%c10, %c0_52], %51 {strides = array<i32>} : memref<16x32xf32, #tpu.memory_space<vmem>>, vector<1x32xf32>,
    %c1_53 = arith.constant 1 : index
    %c5_54 = arith.constant 5 : index
    %53 = memref.load %arg1[%c1_53, %c5_54] : memref<2x8xi32, #tpu.memory_space<smem>>
    %54 = arith.index_cast %53 : i32 to index
    %c0_55 = arith.constant 0 : index
    %55 = vector.load %arg2[%54, %c0_55] : memref<50x32xf32, #tpu.memory_space<vmem>>, vector<1x32xf32>
    %c11 = arith.constant 11 : index
    %c0_56 = arith.constant 0 : index
    %56 = vector.load %arg6[%c11, %c0_56] : memref<16x32xf32, #tpu.memory_space<vmem>>, vector<1x32xf32>
    tpu.vector_store %arg6[%c11, %c0_56], %55 {strides = array<i32>} : memref<16x32xf32, #tpu.memory_space<vmem>>, vector<1x32xf32>,
    %c0_57 = arith.constant 0 : index
    %c6_58 = arith.constant 6 : index
    %57 = memref.load %arg1[%c0_57, %c6_58] : memref<2x8xi32, #tpu.memory_space<smem>>
    %58 = arith.index_cast %57 : i32 to index
    %c0_59 = arith.constant 0 : index
    %59 = vector.load %arg2[%58, %c0_59] : memref<50x32xf32, #tpu.memory_space<vmem>>, vector<1x32xf32>
    %c12 = arith.constant 12 : index
    %c0_60 = arith.constant 0 : index
    %60 = vector.load %arg6[%c12, %c0_60] : memref<16x32xf32, #tpu.memory_space<vmem>>, vector<1x32xf32>
    tpu.vector_store %arg6[%c12, %c0_60], %59 {strides = array<i32>} : memref<16x32xf32, #tpu.memory_space<vmem>>, vector<1x32xf32>,
    %c1_61 = arith.constant 1 : index
    %c6_62 = arith.constant 6 : index
    %61 = memref.load %arg1[%c1_61, %c6_62] : memref<2x8xi32, #tpu.memory_space<smem>>
    %62 = arith.index_cast %61 : i32 to index
    %c0_63 = arith.constant 0 : index
    %63 = vector.load %arg2[%62, %c0_63] : memref<50x32xf32, #tpu.memory_space<vmem>>, vector<1x32xf32>
    %c13 = arith.constant 13 : index
    %c0_64 = arith.constant 0 : index
    %64 = vector.load %arg6[%c13, %c0_64] : memref<16x32xf32, #tpu.memory_space<vmem>>, vector<1x32xf32>
    tpu.vector_store %arg6[%c13, %c0_64], %63 {strides = array<i32>} : memref<16x32xf32, #tpu.memory_space<vmem>>, vector<1x32xf32>,
    %c0_65 = arith.constant 0 : index
    %c7_66 = arith.constant 7 : index
    %65 = memref.load %arg1[%c0_65, %c7_66] : memref<2x8xi32, #tpu.memory_space<smem>>
    %66 = arith.index_cast %65 : i32 to index
    %c0_67 = arith.constant 0 : index
    %67 = vector.load %arg2[%66, %c0_67] : memref<50x32xf32, #tpu.memory_space<vmem>>, vector<1x32xf32>
    %c14 = arith.constant 14 : index
    %c0_68 = arith.constant 0 : index
    %68 = vector.load %arg6[%c14, %c0_68] : memref<16x32xf32, #tpu.memory_space<vmem>>, vector<1x32xf32>
    tpu.vector_store %arg6[%c14, %c0_68], %67 {strides = array<i32>} : memref<16x32xf32, #tpu.memory_space<vmem>>, vector<1x32xf32>,
    %c1_69 = arith.constant 1 : index
    %c7_70 = arith.constant 7 : index
    %69 = memref.load %arg1[%c1_69, %c7_70] : memref<2x8xi32, #tpu.memory_space<smem>>
    %70 = arith.index_cast %69 : i32 to index
    %c0_71 = arith.constant 0 : index
    %71 = vector.load %arg2[%70, %c0_71] : memref<50x32xf32, #tpu.memory_space<vmem>>, vector<1x32xf32>
    %c15 = arith.constant 15 : index
    %c0_72 = arith.constant 0 : index
    %72 = vector.load %arg6[%c15, %c0_72] : memref<16x32xf32, #tpu.memory_space<vmem>>, vector<1x32xf32>
    tpu.vector_store %arg6[%c15, %c0_72], %71 {strides = array<i32>} : memref<16x32xf32, #tpu.memory_space<vmem>>, vector<1x32xf32>,
    %c0_73 = arith.constant 0 : index
    %c0_74 = arith.constant 0 : index
    %73 = vector.load %arg3[%c0_73, %c0_74] : memref<65x128xf32, #tpu.memory_space<vmem>>, vector<32x128xf32>
    %c32 = arith.constant 32 : index
    %c0_75 = arith.constant 0 : index
    %74 = vector.load %arg3[%c32, %c0_75] : memref<65x128xf32, #tpu.memory_space<vmem>>, vector<32x128xf32>
    %c64 = arith.constant 64 : index
    %c0_76 = arith.constant 0 : index
    %75 = vector.load %arg3[%c64, %c0_76] : memref<65x128xf32, #tpu.memory_space<vmem>>, vector<1x128xf32>
    %c0_77 = arith.constant 0 : index
    %c0_78 = arith.constant 0 : index
    %76 = vector.load %arg6[%c0_77, %c0_78] : memref<16x32xf32, #tpu.memory_space<vmem>>, vector<16x32xf32>
    %cst_79 = arith.constant dense<0.000000e+00> : vector<16x128xf32>
    %77 = tpu.matmul %76, %73, %cst_79 {dimension_numbers = #tpu.dot_dimension_numbers<[1], [0], [0], [1], [0, 0, 1, 1], [], []>} : vector<16x32xf32>, vector<32x128xf32>, vector<16x128xf32> -> vector<16x128xf32>
    %78 = vector.broadcast %75 : vector<1x128xf32> to vector<16x128xf32>
    %79 = arith.addf %77, %78 : vector<16x128xf32>
    %80 = tpu.iota {dimensions = array<i32: 1>} : vector<2x128xi32>
    %c64_i32 = arith.constant 64 : i32
    %81 = vector.broadcast %c64_i32 : i32 to vector<2x128xi32>
    %82 = arith.cmpi sge, %80, %81 : vector<2x128xi32>
    %c96_i32 = arith.constant 96 : i32
    %83 = vector.broadcast %c96_i32 : i32 to vector<2x128xi32>
    %84 = arith.cmpi slt, %80, %83 : vector<2x128xi32>
    %85 = arith.andi %82, %84 : vector<2x128xi1>
    %cst_80 = arith.constant 0.000000e+00 : f32
    %86 = vector.broadcast %cst_80 : f32 to vector<2x32xf32>
    %cst_81 = arith.constant 0.000000e+00 : f32
    %87 = vector.broadcast %cst_81 : f32 to vector<2x32xf32>
    %88 = vector.extract_strided_slice %79 {offsets = [0, 0], sizes = [2, 128], strides = [1, 1]} : vector<16x128xf32> to vector<2x128xf32>
    %cst_82 = arith.constant dense<0.000000e+00> : vector<2x128xf32>
    %89 = tpu.matmul %86, %74, %cst_82 {dimension_numbers = #tpu.dot_dimension_numbers<[1], [0], [0], [1], [0, 0, 1, 1], [], []>} : vector<2x32xf32>, vector<32x128xf32>, vector<2x128xf32> -> vector<2x128xf32>
    %90 = arith.addf %88, %89 : vector<2x128xf32>
    %cst_83 = arith.constant 5.000000e-01 : f32
    %91 = vector.broadcast %cst_83 : f32 to vector<2x128xf32>
    %92 = arith.mulf %91, %90 : vector<2x128xf32>
    %93 = arith.select %85, %90, %92 : vector<2x128xi1>, vector<2x128xf32>
    %94 = math.tanh %93 : vector<2x128xf32>
    %cst_84 = arith.constant 5.000000e-01 : f32
    %95 = vector.broadcast %cst_84 : f32 to vector<2x128xf32>
    %96 = arith.mulf %95, %94 : vector<2x128xf32>
    %cst_85 = arith.constant 5.000000e-01 : f32
    %97 = vector.broadcast %cst_85 : f32 to vector<2x128xf32>
    %98 = arith.addf %96, %97 : vector<2x128xf32>
    %99 = arith.select %85, %94, %98 : vector<2x128xi1>, vector<2x128xf32>
    %100 = vector.extract_strided_slice %99 {offsets = [0, 0], sizes = [2, 32], strides = [1, 1]} : vector<2x128xf32> to vector<2x32xf32>
    %101 = vector.extract_strided_slice %99 {offsets = [0, 32], sizes = [2, 32], strides = [1, 1]} : vector<2x128xf32> to vector<2x32xf32>
    %102 = vector.extract_strided_slice %99 {offsets = [0, 64], sizes = [2, 32], strides = [1, 1]} : vector<2x128xf32> to vector<2x32xf32>
    %103 = vector.extract_strided_slice %99 {offsets = [0, 96], sizes = [2, 32], strides = [1, 1]} : vector<2x128xf32> to vector<2x32xf32>
    %104 = arith.mulf %101, %87 : vector<2x32xf32>
    %105 = arith.mulf %100, %102 : vector<2x32xf32>
    %106 = arith.addf %104, %105 : vector<2x32xf32>
    %107 = math.tanh %106 : vector<2x32xf32>
    %108 = arith.mulf %103, %107 : vector<2x32xf32>
    %109 = vector.extract_strided_slice %79 {offsets = [2, 0], sizes = [2, 128], strides = [1, 1]} : vector<16x128xf32> to vector<2x128xf32>
    %cst_86 = arith.constant dense<0.000000e+00> : vector<2x128xf32>
    %110 = tpu.matmul %108, %74, %cst_86 {dimension_numbers = #tpu.dot_dimension_numbers<[1], [0], [0], [1], [0, 0, 1, 1], [], []>} : vector<2x32xf32>, vector<32x128xf32>, vector<2x128xf32> -> vector<2x128xf32>
    %111 = arith.addf %109, %110 : vector<2x128xf32>
    %cst_87 = arith.constant 5.000000e-01 : f32
    %112 = vector.broadcast %cst_87 : f32 to vector<2x128xf32>
    %113 = arith.mulf %112, %111 : vector<2x128xf32>
    %114 = arith.select %85, %111, %113 : vector<2x128xi1>, vector<2x128xf32>
    %115 = math.tanh %114 : vector<2x128xf32>
    %cst_88 = arith.constant 5.000000e-01 : f32
    %116 = vector.broadcast %cst_88 : f32 to vector<2x128xf32>
    %117 = arith.mulf %116, %115 : vector<2x128xf32>
    %cst_89 = arith.constant 5.000000e-01 : f32
    %118 = vector.broadcast %cst_89 : f32 to vector<2x128xf32>
    %119 = arith.addf %117, %118 : vector<2x128xf32>
    %120 = arith.select %85, %115, %119 : vector<2x128xi1>, vector<2x128xf32>
    %121 = vector.extract_strided_slice %120 {offsets = [0, 0], sizes = [2, 32], strides = [1, 1]} : vector<2x128xf32> to vector<2x32xf32>
    %122 = vector.extract_strided_slice %120 {offsets = [0, 32], sizes = [2, 32], strides = [1, 1]} : vector<2x128xf32> to vector<2x32xf32>
    %123 = vector.extract_strided_slice %120 {offsets = [0, 64], sizes = [2, 32], strides = [1, 1]} : vector<2x128xf32> to vector<2x32xf32>
    %124 = vector.extract_strided_slice %120 {offsets = [0, 96], sizes = [2, 32], strides = [1, 1]} : vector<2x128xf32> to vector<2x32xf32>
    %125 = arith.mulf %122, %106 : vector<2x32xf32>
    %126 = arith.mulf %121, %123 : vector<2x32xf32>
    %127 = arith.addf %125, %126 : vector<2x32xf32>
    %128 = math.tanh %127 : vector<2x32xf32>
    %129 = arith.mulf %124, %128 : vector<2x32xf32>
    %130 = vector.extract_strided_slice %79 {offsets = [4, 0], sizes = [2, 128], strides = [1, 1]} : vector<16x128xf32> to vector<2x128xf32>
    %cst_90 = arith.constant dense<0.000000e+00> : vector<2x128xf32>
    %131 = tpu.matmul %129, %74, %cst_90 {dimension_numbers = #tpu.dot_dimension_numbers<[1], [0], [0], [1], [0, 0, 1, 1], [], []>} : vector<2x32xf32>, vector<32x128xf32>, vector<2x128xf32> -> vector<2x128xf32>
    %132 = arith.addf %130, %131 : vector<2x128xf32>
    %cst_91 = arith.constant 5.000000e-01 : f32
    %133 = vector.broadcast %cst_91 : f32 to vector<2x128xf32>
    %134 = arith.mulf %133, %132 : vector<2x128xf32>
    %135 = arith.select %85, %132, %134 : vector<2x128xi1>, vector<2x128xf32>
    %136 = math.tanh %135 : vector<2x128xf32>
    %cst_92 = arith.constant 5.000000e-01 : f32
    %137 = vector.broadcast %cst_92 : f32 to vector<2x128xf32>
    %138 = arith.mulf %137, %136 : vector<2x128xf32>
    %cst_93 = arith.constant 5.000000e-01 : f32
    %139 = vector.broadcast %cst_93 : f32 to vector<2x128xf32>
    %140 = arith.addf %138, %139 : vector<2x128xf32>
    %141 = arith.select %85, %136, %140 : vector<2x128xi1>, vector<2x128xf32>
    %142 = vector.extract_strided_slice %141 {offsets = [0, 0], sizes = [2, 32], strides = [1, 1]} : vector<2x128xf32> to vector<2x32xf32>
    %143 = vector.extract_strided_slice %141 {offsets = [0, 32], sizes = [2, 32], strides = [1, 1]} : vector<2x128xf32> to vector<2x32xf32>
    %144 = vector.extract_strided_slice %141 {offsets = [0, 64], sizes = [2, 32], strides = [1, 1]} : vector<2x128xf32> to vector<2x32xf32>
    %145 = vector.extract_strided_slice %141 {offsets = [0, 96], sizes = [2, 32], strides = [1, 1]} : vector<2x128xf32> to vector<2x32xf32>
    %146 = arith.mulf %143, %127 : vector<2x32xf32>
    %147 = arith.mulf %142, %144 : vector<2x32xf32>
    %148 = arith.addf %146, %147 : vector<2x32xf32>
    %149 = math.tanh %148 : vector<2x32xf32>
    %150 = arith.mulf %145, %149 : vector<2x32xf32>
    %151 = vector.extract_strided_slice %79 {offsets = [6, 0], sizes = [2, 128], strides = [1, 1]} : vector<16x128xf32> to vector<2x128xf32>
    %cst_94 = arith.constant dense<0.000000e+00> : vector<2x128xf32>
    %152 = tpu.matmul %150, %74, %cst_94 {dimension_numbers = #tpu.dot_dimension_numbers<[1], [0], [0], [1], [0, 0, 1, 1], [], []>} : vector<2x32xf32>, vector<32x128xf32>, vector<2x128xf32> -> vector<2x128xf32>
    %153 = arith.addf %151, %152 : vector<2x128xf32>
    %cst_95 = arith.constant 5.000000e-01 : f32
    %154 = vector.broadcast %cst_95 : f32 to vector<2x128xf32>
    %155 = arith.mulf %154, %153 : vector<2x128xf32>
    %156 = arith.select %85, %153, %155 : vector<2x128xi1>, vector<2x128xf32>
    %157 = math.tanh %156 : vector<2x128xf32>
    %cst_96 = arith.constant 5.000000e-01 : f32
    %158 = vector.broadcast %cst_96 : f32 to vector<2x128xf32>
    %159 = arith.mulf %158, %157 : vector<2x128xf32>
    %cst_97 = arith.constant 5.000000e-01 : f32
    %160 = vector.broadcast %cst_97 : f32 to vector<2x128xf32>
    %161 = arith.addf %159, %160 : vector<2x128xf32>
    %162 = arith.select %85, %157, %161 : vector<2x128xi1>, vector<2x128xf32>
    %163 = vector.extract_strided_slice %162 {offsets = [0, 0], sizes = [2, 32], strides = [1, 1]} : vector<2x128xf32> to vector<2x32xf32>
    %164 = vector.extract_strided_slice %162 {offsets = [0, 32], sizes = [2, 32], strides = [1, 1]} : vector<2x128xf32> to vector<2x32xf32>
    %165 = vector.extract_strided_slice %162 {offsets = [0, 64], sizes = [2, 32], strides = [1, 1]} : vector<2x128xf32> to vector<2x32xf32>
    %166 = vector.extract_strided_slice %162 {offsets = [0, 96], sizes = [2, 32], strides = [1, 1]} : vector<2x128xf32> to vector<2x32xf32>
    %167 = arith.mulf %164, %148 : vector<2x32xf32>
    %168 = arith.mulf %163, %165 : vector<2x32xf32>
    %169 = arith.addf %167, %168 : vector<2x32xf32>
    %170 = math.tanh %169 : vector<2x32xf32>
    %171 = arith.mulf %166, %170 : vector<2x32xf32>
    %172 = vector.extract_strided_slice %79 {offsets = [8, 0], sizes = [2, 128], strides = [1, 1]} : vector<16x128xf32> to vector<2x128xf32>
    %cst_98 = arith.constant dense<0.000000e+00> : vector<2x128xf32>
    %173 = tpu.matmul %171, %74, %cst_98 {dimension_numbers = #tpu.dot_dimension_numbers<[1], [0], [0], [1], [0, 0, 1, 1], [], []>} : vector<2x32xf32>, vector<32x128xf32>, vector<2x128xf32> -> vector<2x128xf32>
    %174 = arith.addf %172, %173 : vector<2x128xf32>
    %cst_99 = arith.constant 5.000000e-01 : f32
    %175 = vector.broadcast %cst_99 : f32 to vector<2x128xf32>
    %176 = arith.mulf %175, %174 : vector<2x128xf32>
    %177 = arith.select %85, %174, %176 : vector<2x128xi1>, vector<2x128xf32>
    %178 = math.tanh %177 : vector<2x128xf32>
    %cst_100 = arith.constant 5.000000e-01 : f32
    %179 = vector.broadcast %cst_100 : f32 to vector<2x128xf32>
    %180 = arith.mulf %179, %178 : vector<2x128xf32>
    %cst_101 = arith.constant 5.000000e-01 : f32
    %181 = vector.broadcast %cst_101 : f32 to vector<2x128xf32>
    %182 = arith.addf %180, %181 : vector<2x128xf32>
    %183 = arith.select %85, %178, %182 : vector<2x128xi1>, vector<2x128xf32>
    %184 = vector.extract_strided_slice %183 {offsets = [0, 0], sizes = [2, 32], strides = [1, 1]} : vector<2x128xf32> to vector<2x32xf32>
    %185 = vector.extract_strided_slice %183 {offsets = [0, 32], sizes = [2, 32], strides = [1, 1]} : vector<2x128xf32> to vector<2x32xf32>
    %186 = vector.extract_strided_slice %183 {offsets = [0, 64], sizes = [2, 32], strides = [1, 1]} : vector<2x128xf32> to vector<2x32xf32>
    %187 = vector.extract_strided_slice %183 {offsets = [0, 96], sizes = [2, 32], strides = [1, 1]} : vector<2x128xf32> to vector<2x32xf32>
    %188 = arith.mulf %185, %169 : vector<2x32xf32>
    %189 = arith.mulf %184, %186 : vector<2x32xf32>
    %190 = arith.addf %188, %189 : vector<2x32xf32>
    %191 = math.tanh %190 : vector<2x32xf32>
    %192 = arith.mulf %187, %191 : vector<2x32xf32>
    %193 = vector.extract_strided_slice %79 {offsets = [10, 0], sizes = [2, 128], strides = [1, 1]} : vector<16x128xf32> to vector<2x128xf32>
    %cst_102 = arith.constant dense<0.000000e+00> : vector<2x128xf32>
    %194 = tpu.matmul %192, %74, %cst_102 {dimension_numbers = #tpu.dot_dimension_numbers<[1], [0], [0], [1], [0, 0, 1, 1], [], []>} : vector<2x32xf32>, vector<32x128xf32>, vector<2x128xf32> -> vector<2x128xf32>
    %195 = arith.addf %193, %194 : vector<2x128xf32>
    %cst_103 = arith.constant 5.000000e-01 : f32
    %196 = vector.broadcast %cst_103 : f32 to vector<2x128xf32>
    %197 = arith.mulf %196, %195 : vector<2x128xf32>
    %198 = arith.select %85, %195, %197 : vector<2x128xi1>, vector<2x128xf32>
    %199 = math.tanh %198 : vector<2x128xf32>
    %cst_104 = arith.constant 5.000000e-01 : f32
    %200 = vector.broadcast %cst_104 : f32 to vector<2x128xf32>
    %201 = arith.mulf %200, %199 : vector<2x128xf32>
    %cst_105 = arith.constant 5.000000e-01 : f32
    %202 = vector.broadcast %cst_105 : f32 to vector<2x128xf32>
    %203 = arith.addf %201, %202 : vector<2x128xf32>
    %204 = arith.select %85, %199, %203 : vector<2x128xi1>, vector<2x128xf32>
    %205 = vector.extract_strided_slice %204 {offsets = [0, 0], sizes = [2, 32], strides = [1, 1]} : vector<2x128xf32> to vector<2x32xf32>
    %206 = vector.extract_strided_slice %204 {offsets = [0, 32], sizes = [2, 32], strides = [1, 1]} : vector<2x128xf32> to vector<2x32xf32>
    %207 = vector.extract_strided_slice %204 {offsets = [0, 64], sizes = [2, 32], strides = [1, 1]} : vector<2x128xf32> to vector<2x32xf32>
    %208 = vector.extract_strided_slice %204 {offsets = [0, 96], sizes = [2, 32], strides = [1, 1]} : vector<2x128xf32> to vector<2x32xf32>
    %209 = arith.mulf %206, %190 : vector<2x32xf32>
    %210 = arith.mulf %205, %207 : vector<2x32xf32>
    %211 = arith.addf %209, %210 : vector<2x32xf32>
    %212 = math.tanh %211 : vector<2x32xf32>
    %213 = arith.mulf %208, %212 : vector<2x32xf32>
    %214 = vector.extract_strided_slice %79 {offsets = [12, 0], sizes = [2, 128], strides = [1, 1]} : vector<16x128xf32> to vector<2x128xf32>
    %cst_106 = arith.constant dense<0.000000e+00> : vector<2x128xf32>
    %215 = tpu.matmul %213, %74, %cst_106 {dimension_numbers = #tpu.dot_dimension_numbers<[1], [0], [0], [1], [0, 0, 1, 1], [], []>} : vector<2x32xf32>, vector<32x128xf32>, vector<2x128xf32> -> vector<2x128xf32>
    %216 = arith.addf %214, %215 : vector<2x128xf32>
    %cst_107 = arith.constant 5.000000e-01 : f32
    %217 = vector.broadcast %cst_107 : f32 to vector<2x128xf32>
    %218 = arith.mulf %217, %216 : vector<2x128xf32>
    %219 = arith.select %85, %216, %218 : vector<2x128xi1>, vector<2x128xf32>
    %220 = math.tanh %219 : vector<2x128xf32>
    %cst_108 = arith.constant 5.000000e-01 : f32
    %221 = vector.broadcast %cst_108 : f32 to vector<2x128xf32>
    %222 = arith.mulf %221, %220 : vector<2x128xf32>
    %cst_109 = arith.constant 5.000000e-01 : f32
    %223 = vector.broadcast %cst_109 : f32 to vector<2x128xf32>
    %224 = arith.addf %222, %223 : vector<2x128xf32>
    %225 = arith.select %85, %220, %224 : vector<2x128xi1>, vector<2x128xf32>
    %226 = vector.extract_strided_slice %225 {offsets = [0, 0], sizes = [2, 32], strides = [1, 1]} : vector<2x128xf32> to vector<2x32xf32>
    %227 = vector.extract_strided_slice %225 {offsets = [0, 32], sizes = [2, 32], strides = [1, 1]} : vector<2x128xf32> to vector<2x32xf32>
    %228 = vector.extract_strided_slice %225 {offsets = [0, 64], sizes = [2, 32], strides = [1, 1]} : vector<2x128xf32> to vector<2x32xf32>
    %229 = vector.extract_strided_slice %225 {offsets = [0, 96], sizes = [2, 32], strides = [1, 1]} : vector<2x128xf32> to vector<2x32xf32>
    %230 = arith.mulf %227, %211 : vector<2x32xf32>
    %231 = arith.mulf %226, %228 : vector<2x32xf32>
    %232 = arith.addf %230, %231 : vector<2x32xf32>
    %233 = math.tanh %232 : vector<2x32xf32>
    %234 = arith.mulf %229, %233 : vector<2x32xf32>
    %235 = vector.extract_strided_slice %79 {offsets = [14, 0], sizes = [2, 128], strides = [1, 1]} : vector<16x128xf32> to vector<2x128xf32>
    %cst_110 = arith.constant dense<0.000000e+00> : vector<2x128xf32>
    %236 = tpu.matmul %234, %74, %cst_110 {dimension_numbers = #tpu.dot_dimension_numbers<[1], [0], [0], [1], [0, 0, 1, 1], [], []>} : vector<2x32xf32>, vector<32x128xf32>, vector<2x128xf32> -> vector<2x128xf32>
    %237 = arith.addf %235, %236 : vector<2x128xf32>
    %cst_111 = arith.constant 5.000000e-01 : f32
    %238 = vector.broadcast %cst_111 : f32 to vector<2x128xf32>
    %239 = arith.mulf %238, %237 : vector<2x128xf32>
    %240 = arith.select %85, %237, %239 : vector<2x128xi1>, vector<2x128xf32>
    %241 = math.tanh %240 : vector<2x128xf32>
    %cst_112 = arith.constant 5.000000e-01 : f32
    %242 = vector.broadcast %cst_112 : f32 to vector<2x128xf32>
    %243 = arith.mulf %242, %241 : vector<2x128xf32>
    %cst_113 = arith.constant 5.000000e-01 : f32
    %244 = vector.broadcast %cst_113 : f32 to vector<2x128xf32>
    %245 = arith.addf %243, %244 : vector<2x128xf32>
    %246 = arith.select %85, %241, %245 : vector<2x128xi1>, vector<2x128xf32>
    %247 = vector.extract_strided_slice %246 {offsets = [0, 0], sizes = [2, 32], strides = [1, 1]} : vector<2x128xf32> to vector<2x32xf32>
    %248 = vector.extract_strided_slice %246 {offsets = [0, 32], sizes = [2, 32], strides = [1, 1]} : vector<2x128xf32> to vector<2x32xf32>
    %249 = vector.extract_strided_slice %246 {offsets = [0, 64], sizes = [2, 32], strides = [1, 1]} : vector<2x128xf32> to vector<2x32xf32>
    %250 = vector.extract_strided_slice %246 {offsets = [0, 96], sizes = [2, 32], strides = [1, 1]} : vector<2x128xf32> to vector<2x32xf32>
    %251 = arith.mulf %248, %232 : vector<2x32xf32>
    %252 = arith.mulf %247, %249 : vector<2x32xf32>
    %253 = arith.addf %251, %252 : vector<2x32xf32>
    %254 = math.tanh %253 : vector<2x32xf32>
    %255 = arith.mulf %250, %254 : vector<2x32xf32>
    %c8_114 = arith.constant 8 : index
    %c0_115 = arith.constant 0 : index
    %256 = vector.load %arg4[%c8_114, %c0_115] : memref<65x8xf32, #tpu.memory_space<vmem>>, vector<32x8xf32>
    %c40 = arith.constant 40 : index
    %c0_116 = arith.constant 0 : index
    %257 = vector.load %arg4[%c40, %c0_116] : memref<65x8xf32, #tpu.memory_space<vmem>>, vector<1x8xf32>
    %cst_117 = arith.constant dense<0.000000e+00> : vector<2x8xf32>
    %258 = tpu.matmul %255, %256, %cst_117 {dimension_numbers = #tpu.dot_dimension_numbers<[1], [0], [0], [1], [0, 0, 1, 1], [], []>} : vector<2x32xf32>, vector<32x8xf32>, vector<2x8xf32> -> vector<2x8xf32>
    %259 = vector.broadcast %257 : vector<1x8xf32> to vector<2x8xf32>
    %260 = arith.addf %258, %259 : vector<2x8xf32>
    %c48 = arith.constant 48 : index
    %c0_118 = arith.constant 0 : index
    %261 = vector.load %arg4[%c48, %c0_118] : memref<65x8xf32, #tpu.memory_space<vmem>>, vector<8x8xf32>
    %c56 = arith.constant 56 : index
    %c0_119 = arith.constant 0 : index
    %262 = vector.load %arg4[%c56, %c0_119] : memref<65x8xf32, #tpu.memory_space<vmem>>, vector<8x8xf32>
    %c64_120 = arith.constant 64 : index
    %c0_121 = arith.constant 0 : index
    %263 = vector.load %arg4[%c64_120, %c0_121] : memref<65x8xf32, #tpu.memory_space<vmem>>, vector<1x8xf32>
    %cst_122 = arith.constant dense<0.000000e+00> : vector<2x8xf32>
    %264 = tpu.matmul %8, %261, %cst_122 {dimension_numbers = #tpu.dot_dimension_numbers<[1], [0], [0], [1], [0, 0, 1, 1], [], []>} : vector<2x8xf32>, vector<8x8xf32>, vector<2x8xf32> -> vector<2x8xf32>
    %cst_123 = arith.constant dense<0.000000e+00> : vector<2x8xf32>
    %265 = tpu.matmul %260, %262, %cst_123 {dimension_numbers = #tpu.dot_dimension_numbers<[1], [0], [0], [1], [0, 0, 1, 1], [], []>} : vector<2x8xf32>, vector<8x8xf32>, vector<2x8xf32> -> vector<2x8xf32>
    %266 = arith.addf %264, %265 : vector<2x8xf32>
    %267 = vector.broadcast %263 : vector<1x8xf32> to vector<2x8xf32>
    %268 = arith.addf %266, %267 : vector<2x8xf32>
    %c0_124 = arith.constant 0 : index
    %c0_125 = arith.constant 0 : index
    %269 = vector.load %arg5[%c0_124, %c0_125] : memref<2x8xf32, #tpu.memory_space<vmem>>, vector<2x8xf32>
    tpu.vector_store %arg5[%c0_124, %c0_125], %268 {strides = array<i32>} : memref<2x8xf32, #tpu.memory_space<vmem>>, vector<2x8xf32>,
    return
  }
}

</mosaic_0001>

<llo_original>
// kernel: tpu_custom_call.1
$region0: #{tpu_custom_call.1}
  #allocation0 [shape = 'u32[]', space=smem, size = 0x4, offset = 0x4, fixed_abs, tag = 'smem constant byte address 0x4 - core index']
  #allocation1 [shape = 'u32[72,128]{1,0:T(1,128)}', space=vmem, size = 0x9000, scoped, tag = 'internal scratch']
  #allocation2 [shape = 'f32[16,32]{1,0:T(8,128)}', space=vmem, size = 0x2000, scoped, tag = 'scratch operand']
  %s0 = inlined_call_operand.vmem [shape: f32[2,4,256], index: 0, kind: input, shape index: {}]
  %s1 = inlined_call_operand.vmem [shape: s32[2,8], index: 1, kind: input, shape index: {}]
  %s2 = inlined_call_operand.vmem [shape: f32[50,32], index: 2, kind: input, shape index: {}]
  %s3 = inlined_call_operand.vmem [shape: f32[65,128], index: 3, kind: input, shape index: {}]
  %s4 = inlined_call_operand.vmem [shape: f32[65,8], index: 4, kind: input, shape index: {}]
  %s5 = inlined_call_operand.hbm [shape: f32[2,8], index: 5, kind: output, shape index: {}]
  %s6 = sld [smem:[#allocation0]]
  $region34: #{tpu_custom_call.1} parent=0
    _
  %s8 = ssub.s32 1, %s6
  %s9 = scalar_select 0, %s8, %s6
  $region1: #{tpu_custom_call.1} parent=0
    #allocation3 [shape = 'u8[1024]{0}', space=smem, size = 0x400, scoped, tag = 'input window, operand 1, single buffered']
    #allocation4 [shape = 's32[1]{0}', space=sflag, size = 0x4, scoped, tag = 'scoped memory for tpu_custom_call.1']
    #allocation5 [shape = 's32[1]{0}', space=sflag, size = 0x4, scoped, tag = 'scoped memory for tpu_custom_call.1']
    #allocation6 [shape = 'u8[1024]{0}', space=vmem, size = 0x400, scoped, tag = 'output window, operand 0, single buffered']
    %10 = vsyncpa [#allocation5], 0
    %11 = vsyncpa [#allocation4], 0
    // Predicated region
    $region2: #{tpu_custom_call.1} parent=1 // pred_check
      _
    $region3: #{tpu_custom_call.1} parent=1 // pred_check_branch
      %13 = sbr.rel (0) target = $region5
    $region4: #{tpu_custom_call.1} parent=1 // pred_region
      _
    $region5: #{tpu_custom_call.1} parent=1 // pred_fallthru
      _
    // Predicated region
    $region6: #{tpu_custom_call.1} parent=1 // pred_check
      _
    $region7: #{tpu_custom_call.1} parent=1 // pred_check_branch
      %15 = sbr.rel (0) target = $region9
    $region8: #{tpu_custom_call.1} parent=1 // pred_region
      %17 = vsyncadd [#allocation5], 0
      %s19 = sshll.u32 %s1, 4
      %s20 = int_to_ptr.vmem [resolvable:$true] %s19
      %22 = dma.vmem_to_smem %s20, 32, [#allocation3], [#allocation5]
    $region9: #{tpu_custom_call.1} parent=1 // pred_fallthru
      _
    // Predicated region
    $region10: #{tpu_custom_call.1} parent=1 // pred_check
      _
    $region11: #{tpu_custom_call.1} parent=1 // pred_check_branch
      %24 = sbr.rel (0) target = $region13
    $region12: #{tpu_custom_call.1} parent=1 // pred_region
      _
    $region13: #{tpu_custom_call.1} parent=1 // pred_fallthru
      _
    // Predicated region
    $region14: #{tpu_custom_call.1} parent=1 // pred_check
      _
    $region15: #{tpu_custom_call.1} parent=1 // pred_check_branch
      %26 = sbr.rel (0) target = $region17
    $region16: #{tpu_custom_call.1} parent=1 // pred_region
      _
    $region17: #{tpu_custom_call.1} parent=1 // pred_fallthru
      _
    // Predicated region
    $region18: #{tpu_custom_call.1} parent=1 // pred_check
      _
    $region19: #{tpu_custom_call.1} parent=1 // pred_check_branch
      %28 = sbr.rel (0) target = $region21
    $region20: #{tpu_custom_call.1} parent=1 // pred_region
      _
    $region21: #{tpu_custom_call.1} parent=1 // pred_fallthru
      _
    // Predicated region
    $region22: #{tpu_custom_call.1} parent=1 // pred_check
      _
    $region23: #{tpu_custom_call.1} parent=1 // pred_check_branch
      %30 = sbr.rel (0) target = $region25
    $region24: #{tpu_custom_call.1} parent=1 // pred_region
      %32 = dma.done [#allocation5], 32
    $region25: #{tpu_custom_call.1} parent=1 // pred_fallthru
      _
    %33 = sfence
    %v34 = vld [vmem:[%s0] sm:$0xff]
    %v35 = vld [vmem:[%s0 + $0x8] sm:$0xff]
    %38 = vst [vmem:[#allocation1] ss:$2 sm:$0xff] %v34
    %v39 = vld.sshfl [vmem:[#allocation1] sm:$0xff pattern:$0x75316420]
    %v40 = vld.sshfl [vmem:[#allocation1 + $0x8] sm:$0xff pattern:$0x75316420]
    %s41 = scalar_lea.vmem [#allocation1], 16
    %42 = vst [vmem:[%s41] ss:$2 sm:$0xff] %v35
    %v43 = vld.sshfl [vmem:[#allocation1 + $0x10] sm:$0xff pattern:$0x75316420]
    %v44 = vld.sshfl [vmem:[#allocation1 + $0x18] sm:$0xff pattern:$0x75316420]
    %vm49 = vcmask 1043456
    %v50 = vsel %vm49, %v39, 0.0
    %v51 = vsel %vm49, %v40, 0.0
    %v52 = vadd.f32 %v50, %v51
    %53 = vadd.xlane.f32.xlu0 %v52
    %v54 = vpop.xlane.xlu0 %53
    %v55 = vsel %vm49, %v43, 0.0
    %v56 = vsel %vm49, %v44, 0.0
    %v57 = vadd.f32 %v55, %v56
    %58 = vadd.xlane.f32.xlu0 %v57
    %v59 = vpop.xlane.xlu0 %58
    %v60 = vmul.f32 %v54, 0.00390625
    %v61 = vmul.f32 %v59, 0.00390625
    %v62 = vld [vmem:[%s4] sm:$0xf]
    %v63 = vld [vmem:[%s4 + $0x4] sm:$0x1]
    %v64 = vperm.slane %v63, 0
    %v67 = vlaneseq
    %v68 = vand.u32 %v67, 127
    %v69 = vperm.slane %v60, %v68
    %v70 = vperm.slane %v61, %v68
    %vm71 = vcmask 1041409
    %v72 = vsel %vm71, %v70, %v69
    %vm73 = vcmask 31744
    %v74 = vsel %vm73, %v72, 0
    %v77 = vsel %vm49, %v62, 0
    %79 = vmatpush.msra.mxu0 0.0
    %80 = vmatpush.msra.mxu0 0.0
    %81 = vmatpush.msra.mxu0 0.0
    %82 = vmatpush.msra.mxu0 0.0
    %83 = vmatpush.msra.mxu0 0.0
    %84 = vmatpush.msra.mxu0 0.0
    %85 = vmatpush.msra.mxu0 0.0
    %86 = vmatpush.msra.mxu0 0.0
    %87 = vmatpush.msra.mxu0 0.0
    %88 = vmatpush.msra.mxu0 0.0
    %89 = vmatpush.msra.mxu0 0.0
    %90 = vmatpush.msra.mxu0 0.0
    %91 = vmatpush.msra.mxu0 0.0
    %92 = vmatpush.msra.mxu0 0.0
    %93 = vmatpush.msra.mxu0 0.0
    %94 = vmatpush.msra.mxu0 %v77
    %95 = vmatmul.f32.gmra.mxu0 %v74
    %v96 = vpop.f32.mrf.mxu0
    %v97 = vadd.f32 %v64, %v96
    %98 = vdwg.mxu0
    %s99 = sld [smem:[#allocation3]]
    %s100 = scalar_lea.vmem %s2, %s99
    %v101 = vld [vmem:[%s100] sm:$0x1]
    %vm102 = vcmask 253952
    %103 = vst.msk [vmem:[#allocation2] sm:$0x1] %vm102, %v101
    %s104 = sld [smem:[#allocation3 + $0x80]]
    %s105 = scalar_lea.vmem %s2, %s104
    %v106 = vld [vmem:[%s105] sm:$0x1]
    %107 = vst.msk [vmem:[#allocation2 + $0x1] sm:$0x1] %vm102, %v106
    %s108 = sld [smem:[#allocation3 + $0x1]]
    %s109 = scalar_lea.vmem %s2, %s108
    %v110 = vld [vmem:[%s109] sm:$0x1]
    %111 = vst.msk [vmem:[#allocation2 + $0x2] sm:$0x1] %vm102, %v110
    %s112 = sld [smem:[#allocation3 + $0x81]]
    %s113 = scalar_lea.vmem %s2, %s112
    %v114 = vld [vmem:[%s113] sm:$0x1]
    %115 = vst.msk [vmem:[#allocation2 + $0x3] sm:$0x1] %vm102, %v114
    %s116 = sld [smem:[#allocation3 + $0x2]]
    %s117 = scalar_lea.vmem %s2, %s116
    %v118 = vld [vmem:[%s117] sm:$0x1]
    %119 = vst.msk [vmem:[#allocation2 + $0x4] sm:$0x1] %vm102, %v118
    %s120 = sld [smem:[#allocation3 + $0x82]]
    %s121 = scalar_lea.vmem %s2, %s120
    %v122 = vld [vmem:[%s121] sm:$0x1]
    %123 = vst.msk [vmem:[#allocation2 + $0x5] sm:$0x1] %vm102, %v122
    %s124 = sld [smem:[#allocation3 + $0x3]]
    %s125 = scalar_lea.vmem %s2, %s124
    %v126 = vld [vmem:[%s125] sm:$0x1]
    %127 = vst.msk [vmem:[#allocation2 + $0x6] sm:$0x1] %vm102, %v126
    %s128 = sld [smem:[#allocation3 + $0x83]]
    %s129 = scalar_lea.vmem %s2, %s128
    %v130 = vld [vmem:[%s129] sm:$0x1]
    %131 = vst.msk [vmem:[#allocation2 + $0x7] sm:$0x1] %vm102, %v130
    %s132 = sld [smem:[#allocation3 + $0x4]]
    %s133 = scalar_lea.vmem %s2, %s132
    %v134 = vld [vmem:[%s133] sm:$0x1]
    %135 = vst.msk [vmem:[#allocation2 + $0x8] sm:$0x1] %vm102, %v134
    %s136 = sld [smem:[#allocation3 + $0x84]]
    %s137 = scalar_lea.vmem %s2, %s136
    %v138 = vld [vmem:[%s137] sm:$0x1]
    %139 = vst.msk [vmem:[#allocation2 + $0x9] sm:$0x1] %vm102, %v138
    %s140 = sld [smem:[#allocation3 + $0x5]]
    %s141 = scalar_lea.vmem %s2, %s140
    %v142 = vld [vmem:[%s141] sm:$0x1]
    %143 = vst.msk [vmem:[#allocation2 + $0xa] sm:$0x1] %vm102, %v142
    %s144 = sld [smem:[#allocation3 + $0x85]]
    %s145 = scalar_lea.vmem %s2, %s144
    %v146 = vld [vmem:[%s145] sm:$0x1]
    %147 = vst.msk [vmem:[#allocation2 + $0xb] sm:$0x1] %vm102, %v146
    %s148 = sld [smem:[#allocation3 + $0x6]]
    %s149 = scalar_lea.vmem %s2, %s148
    %v150 = vld [vmem:[%s149] sm:$0x1]
    %151 = vst.msk [vmem:[#allocation2 + $0xc] sm:$0x1] %vm102, %v150
    %s152 = sld [smem:[#allocation3 + $0x86]]
    %s153 = scalar_lea.vmem %s2, %s152
    %v154 = vld [vmem:[%s153] sm:$0x1]
    %155 = vst.msk [vmem:[#allocation2 + $0xd] sm:$0x1] %vm102, %v154
    %s156 = sld [smem:[#allocation3 + $0x7]]
    %s157 = scalar_lea.vmem %s2, %s156
    %v158 = vld [vmem:[%s157] sm:$0x1]
    %159 = vst.msk [vmem:[#allocation2 + $0xe] sm:$0x1] %vm102, %v158
    %s160 = sld [smem:[#allocation3 + $0x87]]
    %s161 = scalar_lea.vmem %s2, %s160
    %v162 = vld [vmem:[%s161] sm:$0x1]
    %163 = vst.msk [vmem:[#allocation2 + $0xf] sm:$0x1] %vm102, %v162
    %v164 = vld [vmem:[%s3] sm:$0xff]
    %v165 = vld [vmem:[%s3 + $0x8] sm:$0xff]
    %v166 = vld [vmem:[%s3 + $0x10] sm:$0xff]
    %v167 = vld [vmem:[%s3 + $0x18] sm:$0xff]
    %v168 = vld [vmem:[%s3 + $0x20] sm:$0xff]
    %v169 = vld [vmem:[%s3 + $0x28] sm:$0xff]
    %v170 = vld [vmem:[%s3 + $0x30] sm:$0xff]
    %v171 = vld [vmem:[%s3 + $0x38] sm:$0xff]
    %v172 = vld [vmem:[%s3 + $0x40] sm:$0x1]
    %v173 = vld [vmem:[#allocation2] sm:$0xff]
    %v174 = vld [vmem:[#allocation2 + $0x8] sm:$0xff]
    %v175 = vperm.slane %v172, 0
    %vm176 = vcmask 261120
    %v178 = vsel %vm176, %v173, 0
    %v181 = vsel %vm176, %v174, 0
    %183 = vmatpush.msra.mxu0 0.0
    %184 = vmatpush.msra.mxu0 0.0
    %185 = vmatpush.msra.mxu0 0.0
    %186 = vmatpush.msra.mxu0 0.0
    %187 = vmatpush.msra.mxu0 0.0
    %188 = vmatpush.msra.mxu0 0.0
    %189 = vmatpush.msra.mxu0 0.0
    %190 = vmatpush.msra.mxu0 0.0
    %191 = vmatpush.msra.mxu0 0.0
    %192 = vmatpush.msra.mxu0 0.0
    %193 = vmatpush.msra.mxu0 0.0
    %194 = vmatpush.msra.mxu0 0.0
    %195 = vmatpush.msra.mxu0 %v167
    %196 = vmatpush.msra.mxu0 %v166
    %197 = vmatpush.msra.mxu0 %v165
    %198 = vmatpush.msra.mxu0 %v164
    %199 = vmatmul.f32.gmra.mxu0 %v178
    %v200 = vpop.f32.mrf.mxu0
    %v201 = vadd.f32 %v175, %v200
    %202 = vmatmul.f32.gmra.mxu0 %v181
    %v203 = vpop.f32.mrf.mxu0
    %v204 = vadd.f32 %v175, %v203
    %205 = vdwg.mxu0
    %vm206 = vcmp.ge.s32.totalorder %v68, 64
    %vm207 = vcmp.lt.s32.totalorder %v68, 96
    %vm208 = vmand %vm206, %vm207
    %v210 = vsel %vm176, 0.0, 0
    %212 = vmatpush.msra.mxu0 0.0
    %213 = vmatpush.msra.mxu0 0.0
    %214 = vmatpush.msra.mxu0 0.0
    %215 = vmatpush.msra.mxu0 0.0
    %216 = vmatpush.msra.mxu0 0.0
    %217 = vmatpush.msra.mxu0 0.0
    %218 = vmatpush.msra.mxu0 0.0
    %219 = vmatpush.msra.mxu0 0.0
    %220 = vmatpush.msra.mxu0 0.0
    %221 = vmatpush.msra.mxu0 0.0
    %222 = vmatpush.msra.mxu0 0.0
    %223 = vmatpush.msra.mxu0 0.0
    %224 = vmatpush.msra.mxu0 %v171
    %225 = vmatpush.msra.mxu0 %v170
    %226 = vmatpush.msra.mxu0 %v169
    %227 = vmatpush.msra.mxu0 %v168
    %228 = vmatmul.f32.gmra.mxu0 %v210
    %v229 = vpop.f32.mrf.mxu0
    %v230 = vadd.f32 0.0, %v229
    %231 = vdwg.mxu0
    %v232 = vadd.f32 %v201, %v230
    %v233 = vmul.f32 %v232, 0.5
    %v234 = vsel %vm208, %v232, %v233
    %v235 = vtanh.pop %v234
    %v236 = vmul.f32 %v235, 0.5
    %v237 = vadd.f32 %v236, 0.5
    %v238 = vsel %vm208, %v235, %v237
    %v239 = vmul.f32 %v238, 0.0
    %241 = vrot.lane.b32.xlu0 %v238, 64
    %v242 = vpop.permute.xlu0 %241
    %v244 = vmul.f32 %v238, %v242
    %246 = vrot.lane.b32.xlu0 %v244, 32
    %v247 = vpop.permute.xlu0 %246
    %v249 = vadd.f32 %v239, %v247
    %v250 = vtanh.pop %v249
    %252 = vrot.lane.b32.xlu0 %v250, 64
    %v253 = vpop.permute.xlu0 %252
    %v255 = vmul.f32 %v238, %v253
    %257 = vrot.lane.b32.xlu0 %v255, 32
    %v258 = vpop.permute.xlu0 %257
    %v259 = vsel %vm176, %v258, 0
    %261 = vmatpush.msra.mxu0 0.0
    %262 = vmatpush.msra.mxu0 0.0
    %263 = vmatpush.msra.mxu0 0.0
    %264 = vmatpush.msra.mxu0 0.0
    %265 = vmatpush.msra.mxu0 0.0
    %266 = vmatpush.msra.mxu0 0.0
    %267 = vmatpush.msra.mxu0 0.0
    %268 = vmatpush.msra.mxu0 0.0
    %269 = vmatpush.msra.mxu0 0.0
    %270 = vmatpush.msra.mxu0 0.0
    %271 = vmatpush.msra.mxu0 0.0
    %272 = vmatpush.msra.mxu0 0.0
    %273 = vmatpush.msra.mxu0 %v171
    %274 = vmatpush.msra.mxu0 %v170
    %275 = vmatpush.msra.mxu0 %v169
    %276 = vmatpush.msra.mxu0 %v168
    %277 = vmatmul.f32.gmra.mxu0 %v259
    %v278 = vpop.f32.mrf.mxu0
    %v279 = vadd.f32 0.0, %v278
    %280 = vdwg.mxu0
    %v282 = vrot.slane %v279, 6
    %v284 = vadd.f32 %v201, %v282
    %v285 = vmul.f32 %v284, 0.5
    %v286 = vsel %vm208, %v284, %v285
    %v287 = vtanh.pop %v286
    %v288 = vmul.f32 %v287, 0.5
    %v289 = vadd.f32 %v288, 0.5
    %v290 = vsel %vm208, %v287, %v289
    %v292 = vrot.slane %v249, 6
    %v294 = vmul.f32 %v290, %v292
    %296 = vrot.lane.b32.xlu0 %v290, 64
    %v297 = vpop.permute.xlu0 %296
    %v299 = vmul.f32 %v290, %v297
    %301 = vrot.lane.b32.xlu0 %v299, 32
    %v302 = vpop.permute.xlu0 %301
    %v304 = vadd.f32 %v294, %v302
    %v305 = vtanh.pop %v304
    %307 = vrot.lane.b32.xlu0 %v305, 64
    %v308 = vpop.permute.xlu0 %307
    %v310 = vmul.f32 %v290, %v308
    %v312 = vrot.slane %v310, 2
    %313 = vrot.lane.b32.xlu0 %v312, 32
    %v314 = vpop.permute.xlu0 %313
    %v315 = vsel %vm176, %v314, 0
    %317 = vmatpush.msra.mxu0 0.0
    %318 = vmatpush.msra.mxu0 0.0
    %319 = vmatpush.msra.mxu0 0.0
    %320 = vmatpush.msra.mxu0 0.0
    %321 = vmatpush.msra.mxu0 0.0
    %322 = vmatpush.msra.mxu0 0.0
    %323 = vmatpush.msra.mxu0 0.0
    %324 = vmatpush.msra.mxu0 0.0
    %325 = vmatpush.msra.mxu0 0.0
    %326 = vmatpush.msra.mxu0 0.0
    %327 = vmatpush.msra.mxu0 0.0
    %328 = vmatpush.msra.mxu0 0.0
    %329 = vmatpush.msra.mxu0 %v171
    %330 = vmatpush.msra.mxu0 %v170
    %331 = vmatpush.msra.mxu0 %v169
    %332 = vmatpush.msra.mxu0 %v168
    %333 = vmatmul.f32.gmra.mxu0 %v315
    %v334 = vpop.f32.mrf.mxu0
    %v335 = vadd.f32 0.0, %v334
    %336 = vdwg.mxu0
    %v338 = vrot.slane %v335, 4
    %v340 = vadd.f32 %v201, %v338
    %v341 = vmul.f32 %v340, 0.5
    %v342 = vsel %vm208, %v340, %v341
    %v343 = vtanh.pop %v342
    %v344 = vmul.f32 %v343, 0.5
    %v345 = vadd.f32 %v344, 0.5
    %v346 = vsel %vm208, %v343, %v345
    %v348 = vrot.slane %v304, 6
    %v350 = vmul.f32 %v346, %v348
    %352 = vrot.lane.b32.xlu0 %v346, 64
    %v353 = vpop.permute.xlu0 %352
    %v355 = vmul.f32 %v346, %v353
    %357 = vrot.lane.b32.xlu0 %v355, 32
    %v358 = vpop.permute.xlu0 %357
    %v360 = vadd.f32 %v350, %v358
    %v361 = vtanh.pop %v360
    %363 = vrot.lane.b32.xlu0 %v361, 64
    %v364 = vpop.permute.xlu0 %363
    %v366 = vmul.f32 %v346, %v364
    %v368 = vrot.slane %v366, 4
    %369 = vrot.lane.b32.xlu0 %v368, 32
    %v370 = vpop.permute.xlu0 %369
    %v371 = vsel %vm176, %v370, 0
    %373 = vmatpush.msra.mxu0 0.0
    %374 = vmatpush.msra.mxu0 0.0
    %375 = vmatpush.msra.mxu0 0.0
    %376 = vmatpush.msra.mxu0 0.0
    %377 = vmatpush.msra.mxu0 0.0
    %378 = vmatpush.msra.mxu0 0.0
    %379 = vmatpush.msra.mxu0 0.0
    %380 = vmatpush.msra.mxu0 0.0
    %381 = vmatpush.msra.mxu0 0.0
    %382 = vmatpush.msra.mxu0 0.0
    %383 = vmatpush.msra.mxu0 0.0
    %384 = vmatpush.msra.mxu0 0.0
    %385 = vmatpush.msra.mxu0 %v171
    %386 = vmatpush.msra.mxu0 %v170
    %387 = vmatpush.msra.mxu0 %v169
    %388 = vmatpush.msra.mxu0 %v168
    %389 = vmatmul.f32.gmra.mxu0 %v371
    %v390 = vpop.f32.mrf.mxu0
    %v391 = vadd.f32 0.0, %v390
    %392 = vdwg.mxu0
    %v394 = vrot.slane %v391, 2
    %v396 = vadd.f32 %v201, %v394
    %v397 = vmul.f32 %v396, 0.5
    %v398 = vsel %vm208, %v396, %v397
    %v399 = vtanh.pop %v398
    %v400 = vmul.f32 %v399, 0.5
    %v401 = vadd.f32 %v400, 0.5
    %v402 = vsel %vm208, %v399, %v401
    %v404 = vrot.slane %v360, 6
    %v406 = vmul.f32 %v402, %v404
    %408 = vrot.lane.b32.xlu0 %v402, 64
    %v409 = vpop.permute.xlu0 %408
    %v411 = vmul.f32 %v402, %v409
    %413 = vrot.lane.b32.xlu0 %v411, 32
    %v414 = vpop.permute.xlu0 %413
    %v416 = vadd.f32 %v406, %v414
    %v417 = vtanh.pop %v416
    %419 = vrot.lane.b32.xlu0 %v417, 64
    %v420 = vpop.permute.xlu0 %419
    %v422 = vmul.f32 %v402, %v420
    %v424 = vrot.slane %v422, 6
    %425 = vrot.lane.b32.xlu0 %v424, 32
    %v426 = vpop.permute.xlu0 %425
    %v427 = vsel %vm176, %v426, 0
    %429 = vmatpush.msra.mxu0 0.0
    %430 = vmatpush.msra.mxu0 0.0
    %431 = vmatpush.msra.mxu0 0.0
    %432 = vmatpush.msra.mxu0 0.0
    %433 = vmatpush.msra.mxu0 0.0
    %434 = vmatpush.msra.mxu0 0.0
    %435 = vmatpush.msra.mxu0 0.0
    %436 = vmatpush.msra.mxu0 0.0
    %437 = vmatpush.msra.mxu0 0.0
    %438 = vmatpush.msra.mxu0 0.0
    %439 = vmatpush.msra.mxu0 0.0
    %440 = vmatpush.msra.mxu0 0.0
    %441 = vmatpush.msra.mxu0 %v171
    %442 = vmatpush.msra.mxu0 %v170
    %443 = vmatpush.msra.mxu0 %v169
    %444 = vmatpush.msra.mxu0 %v168
    %445 = vmatmul.f32.gmra.mxu0 %v427
    %v446 = vpop.f32.mrf.mxu0
    %v447 = vadd.f32 0.0, %v446
    %448 = vdwg.mxu0
    %v449 = vadd.f32 %v204, %v447
    %v450 = vmul.f32 %v449, 0.5
    %v451 = vsel %vm208, %v449, %v450
    %v452 = vtanh.pop %v451
    %v453 = vmul.f32 %v452, 0.5
    %v454 = vadd.f32 %v453, 0.5
    %v455 = vsel %vm208, %v452, %v454
    %v457 = vrot.slane %v416, 6
    %v459 = vmul.f32 %v455, %v457
    %461 = vrot.lane.b32.xlu0 %v455, 64
    %v462 = vpop.permute.xlu0 %461
    %v464 = vmul.f32 %v455, %v462
    %466 = vrot.lane.b32.xlu0 %v464, 32
    %v467 = vpop.permute.xlu0 %466
    %v469 = vadd.f32 %v459, %v467
    %v470 = vtanh.pop %v469
    %472 = vrot.lane.b32.xlu0 %v470, 64
    %v473 = vpop.permute.xlu0 %472
    %v475 = vmul.f32 %v455, %v473
    %477 = vrot.lane.b32.xlu0 %v475, 32
    %v478 = vpop.permute.xlu0 %477
    %v479 = vsel %vm176, %v478, 0
    %481 = vmatpush.msra.mxu0 0.0
    %482 = vmatpush.msra.mxu0 0.0
    %483 = vmatpush.msra.mxu0 0.0
    %484 = vmatpush.msra.mxu0 0.0
    %485 = vmatpush.msra.mxu0 0.0
    %486 = vmatpush.msra.mxu0 0.0
    %487 = vmatpush.msra.mxu0 0.0
    %488 = vmatpush.msra.mxu0 0.0
    %489 = vmatpush.msra.mxu0 0.0
    %490 = vmatpush.msra.mxu0 0.0
    %491 = vmatpush.msra.mxu0 0.0
    %492 = vmatpush.msra.mxu0 0.0
    %493 = vmatpush.msra.mxu0 %v171
    %494 = vmatpush.msra.mxu0 %v170
    %495 = vmatpush.msra.mxu0 %v169
    %496 = vmatpush.msra.mxu0 %v168
    %497 = vmatmul.f32.gmra.mxu0 %v479
    %v498 = vpop.f32.mrf.mxu0
    %v499 = vadd.f32 0.0, %v498
    %500 = vdwg.mxu0
    %v502 = vrot.slane %v499, 6
    %v504 = vadd.f32 %v204, %v502
    %v505 = vmul.f32 %v504, 0.5
    %v506 = vsel %vm208, %v504, %v505
    %v507 = vtanh.pop %v506
    %v508 = vmul.f32 %v507, 0.5
    %v509 = vadd.f32 %v508, 0.5
    %v510 = vsel %vm208, %v507, %v509
    %v512 = vrot.slane %v469, 6
    %v514 = vmul.f32 %v510, %v512
    %516 = vrot.lane.b32.xlu0 %v510, 64
    %v517 = vpop.permute.xlu0 %516
    %v519 = vmul.f32 %v510, %v517
    %521 = vrot.lane.b32.xlu0 %v519, 32
    %v522 = vpop.permute.xlu0 %521
    %v524 = vadd.f32 %v514, %v522
    %v525 = vtanh.pop %v524
    %527 = vrot.lane.b32.xlu0 %v525, 64
    %v528 = vpop.permute.xlu0 %527
    %v530 = vmul.f32 %v510, %v528
    %v532 = vrot.slane %v530, 2
    %533 = vrot.lane.b32.xlu0 %v532, 32
    %v534 = vpop.permute.xlu0 %533
    %v535 = vsel %vm176, %v534, 0
    %537 = vmatpush.msra.mxu0 0.0
    %538 = vmatpush.msra.mxu0 0.0
    %539 = vmatpush.msra.mxu0 0.0
    %540 = vmatpush.msra.mxu0 0.0
    %541 = vmatpush.msra.mxu0 0.0
    %542 = vmatpush.msra.mxu0 0.0
    %543 = vmatpush.msra.mxu0 0.0
    %544 = vmatpush.msra.mxu0 0.0
    %545 = vmatpush.msra.mxu0 0.0
    %546 = vmatpush.msra.mxu0 0.0
    %547 = vmatpush.msra.mxu0 0.0
    %548 = vmatpush.msra.mxu0 0.0
    %549 = vmatpush.msra.mxu0 %v171
    %550 = vmatpush.msra.mxu0 %v170
    %551 = vmatpush.msra.mxu0 %v169
    %552 = vmatpush.msra.mxu0 %v168
    %553 = vmatmul.f32.gmra.mxu0 %v535
    %v554 = vpop.f32.mrf.mxu0
    %v555 = vadd.f32 0.0, %v554
    %556 = vdwg.mxu0
    %v558 = vrot.slane %v555, 4
    %v560 = vadd.f32 %v204, %v558
    %v561 = vmul.f32 %v560, 0.5
    %v562 = vsel %vm208, %v560, %v561
    %v563 = vtanh.pop %v562
    %v564 = vmul.f32 %v563, 0.5
    %v565 = vadd.f32 %v564, 0.5
    %v566 = vsel %vm208, %v563, %v565
    %v568 = vrot.slane %v524, 6
    %v570 = vmul.f32 %v566, %v568
    %572 = vrot.lane.b32.xlu0 %v566, 64
    %v573 = vpop.permute.xlu0 %572
    %v575 = vmul.f32 %v566, %v573
    %577 = vrot.lane.b32.xlu0 %v575, 32
    %v578 = vpop.permute.xlu0 %577
    %v580 = vadd.f32 %v570, %v578
    %v581 = vtanh.pop %v580
    %583 = vrot.lane.b32.xlu0 %v581, 64
    %v584 = vpop.permute.xlu0 %583
    %v586 = vmul.f32 %v566, %v584
    %v588 = vrot.slane %v586, 4
    %589 = vrot.lane.b32.xlu0 %v588, 32
    %v590 = vpop.permute.xlu0 %589
    %v591 = vsel %vm176, %v590, 0
    %593 = vmatpush.msra.mxu0 0.0
    %594 = vmatpush.msra.mxu0 0.0
    %595 = vmatpush.msra.mxu0 0.0
    %596 = vmatpush.msra.mxu0 0.0
    %597 = vmatpush.msra.mxu0 0.0
    %598 = vmatpush.msra.mxu0 0.0
    %599 = vmatpush.msra.mxu0 0.0
    %600 = vmatpush.msra.mxu0 0.0
    %601 = vmatpush.msra.mxu0 0.0
    %602 = vmatpush.msra.mxu0 0.0
    %603 = vmatpush.msra.mxu0 0.0
    %604 = vmatpush.msra.mxu0 0.0
    %605 = vmatpush.msra.mxu0 %v171
    %606 = vmatpush.msra.mxu0 %v170
    %607 = vmatpush.msra.mxu0 %v169
    %608 = vmatpush.msra.mxu0 %v168
    %609 = vmatmul.f32.gmra.mxu0 %v591
    %v610 = vpop.f32.mrf.mxu0
    %v611 = vadd.f32 0.0, %v610
    %612 = vdwg.mxu0
    %v614 = vrot.slane %v611, 2
    %v616 = vadd.f32 %v204, %v614
    %v617 = vmul.f32 %v616, 0.5
    %v618 = vsel %vm208, %v616, %v617
    %v619 = vtanh.pop %v618
    %v620 = vmul.f32 %v619, 0.5
    %v621 = vadd.f32 %v620, 0.5
    %v622 = vsel %vm208, %v619, %v621
    %v624 = vrot.slane %v580, 6
    %v626 = vmul.f32 %v622, %v624
    %628 = vrot.lane.b32.xlu0 %v622, 64
    %v629 = vpop.permute.xlu0 %628
    %v631 = vmul.f32 %v622, %v629
    %633 = vrot.lane.b32.xlu0 %v631, 32
    %v634 = vpop.permute.xlu0 %633
    %v636 = vadd.f32 %v626, %v634
    %v637 = vtanh.pop %v636
    %639 = vrot.lane.b32.xlu0 %v637, 64
    %v640 = vpop.permute.xlu0 %639
    %v642 = vmul.f32 %v622, %v640
    %v643 = vld [vmem:[%s4 + $0x8] sm:$0xff]
    %v644 = vld [vmem:[%s4 + $0x10] sm:$0xff]
    %v645 = vld [vmem:[%s4 + $0x18] sm:$0xff]
    %v646 = vld [vmem:[%s4 + $0x20] sm:$0xff]
    %v647 = vld [vmem:[%s4 + $0x28] sm:$0x1]
    %v648 = vperm.slane %v647, 0
    %v650 = vrot.slane %v642, 6
    %651 = vrot.lane.b32.xlu0 %v650, 32
    %v652 = vpop.permute.xlu0 %651
    %v653 = vsel %vm176, %v652, 0
    %655 = vmatpush.msra.mxu0 0.0
    %656 = vmatpush.msra.mxu0 0.0
    %657 = vmatpush.msra.mxu0 0.0
    %658 = vmatpush.msra.mxu0 0.0
    %659 = vmatpush.msra.mxu0 0.0
    %660 = vmatpush.msra.mxu0 0.0
    %661 = vmatpush.msra.mxu0 0.0
    %662 = vmatpush.msra.mxu0 0.0
    %663 = vmatpush.msra.mxu0 0.0
    %664 = vmatpush.msra.mxu0 0.0
    %665 = vmatpush.msra.mxu0 0.0
    %666 = vmatpush.msra.mxu0 0.0
    %667 = vmatpush.msra.mxu0 %v646
    %668 = vmatpush.msra.mxu0 %v645
    %669 = vmatpush.msra.mxu0 %v644
    %670 = vmatpush.msra.mxu0 %v643
    %671 = vmatmul.f32.gmra.mxu0 %v653
    %v672 = vpop.f32.mrf.mxu0
    %v673 = vadd.f32 %v648, %v672
    %674 = vdwg.mxu0
    %v675 = vld [vmem:[%s4 + $0x30] sm:$0xff]
    %v676 = vld [vmem:[%s4 + $0x38] sm:$0xff]
    %v677 = vld [vmem:[%s4 + $0x40] sm:$0x1]
    %vm678 = vcmask 64512
    %v680 = vsel %vm678, %v673, 0
    %682 = vmatpush.msra.mxu0 0.0
    %683 = vmatpush.msra.mxu0 0.0
    %684 = vmatpush.msra.mxu0 0.0
    %685 = vmatpush.msra.mxu0 0.0
    %686 = vmatpush.msra.mxu0 0.0
    %687 = vmatpush.msra.mxu0 0.0
    %688 = vmatpush.msra.mxu0 0.0
    %689 = vmatpush.msra.mxu0 0.0
    %690 = vmatpush.msra.mxu0 0.0
    %691 = vmatpush.msra.mxu0 0.0
    %692 = vmatpush.msra.mxu0 0.0
    %693 = vmatpush.msra.mxu0 0.0
    %694 = vmatpush.msra.mxu0 0.0
    %695 = vmatpush.msra.mxu0 0.0
    %696 = vmatpush.msra.mxu0 0.0
    %697 = vmatpush.msra.mxu0 %v676
    %698 = vmatmul.f32.gmra.mxu0 %v680
    %v699 = vpop.f32.mrf.mxu0
    %v700 = vadd.f32 0.0, %v699
    %701 = vdwg.mxu0
    %v703 = vsel %vm678, %v97, 0
    %705 = vmatpush.msra.mxu0 0.0
    %706 = vmatpush.msra.mxu0 0.0
    %707 = vmatpush.msra.mxu0 0.0
    %708 = vmatpush.msra.mxu0 0.0
    %709 = vmatpush.msra.mxu0 0.0
    %710 = vmatpush.msra.mxu0 0.0
    %711 = vmatpush.msra.mxu0 0.0
    %712 = vmatpush.msra.mxu0 0.0
    %713 = vmatpush.msra.mxu0 0.0
    %714 = vmatpush.msra.mxu0 0.0
    %715 = vmatpush.msra.mxu0 0.0
    %716 = vmatpush.msra.mxu0 0.0
    %717 = vmatpush.msra.mxu0 0.0
    %718 = vmatpush.msra.mxu0 0.0
    %719 = vmatpush.msra.mxu0 0.0
    %720 = vmatpush.msra.mxu0 %v675
    %721 = vmatmul.f32.gmra.mxu0 %v703
    %v722 = vpop.f32.mrf.mxu0
    %v723 = vadd.f32 %v700, %v722
    %724 = vdwg.mxu0
    %v725 = vperm.slane %v677, 0
    %v726 = vadd.f32 %v723, %v725
    %vm727 = vcmask 58368
    %728 = vst.msk [vmem:[#allocation6] sm:$0x3] %vm727, %v726
    // Predicated region
    $region26: #{tpu_custom_call.1} parent=1 // pred_check
      _
    $region27: #{tpu_custom_call.1} parent=1 // pred_check_branch
      %730 = sbr.rel (0) target = $region29
    $region28: #{tpu_custom_call.1} parent=1 // pred_region
      %732 = vsyncadd [#allocation4], 0
      %s734 = sshll.u32 [#allocation6], 4
      %s735 = int_to_ptr.vmem [resolvable:$true] %s734
      %s736 = sshll.u32 %s5, 4
      %s737 = int_to_ptr.hbm [resolvable:$true] %s736
      %739 = dma.vmem_to_hbm [thread:$0]  %s735, 32, %s737, [#allocation4]
    $region29: #{tpu_custom_call.1} parent=1 // pred_fallthru
      _
    // Predicated region
    $region30: #{tpu_custom_call.1} parent=1 // pred_check
      _
    $region31: #{tpu_custom_call.1} parent=1 // pred_check_branch
      %741 = sbr.rel (0) target = $region33
    $region32: #{tpu_custom_call.1} parent=1 // pred_region
      %743 = dma.done [#allocation4], 32
    $region33: #{tpu_custom_call.1} parent=1 // pred_fallthru
      _
    %744 = vsyncpa [#allocation4], 1
    %745 = vsyncpa [#allocation5], 1

</llo_original>
